<compile_context>
chip_gen: v7x
topology: tpu7x:2x2x1
jax: 0.10.0
libtpu: 0.0.40
codegen_flags: <defaults>
</compile_context>

<pallas_src>
import jax
import jax.numpy as jnp
from jax.experimental import pallas as pl
from jax.experimental.pallas import tpu as pltpu


def _round_up(x: int, m: int) -> int:
    return ((x + m - 1) // m) * m


def _query_projection_kernel(x_ref, w1_ref, b1_ref, w2_ref, b2_ref, o_ref, h_ref):
    # fc1: (tb, E) @ (E, E), f32 accumulation on the MXU; bias + ReLU in f32.
    h = jnp.dot(x_ref[...], w1_ref[...], preferred_element_type=jnp.float32)
    h = jnp.maximum(h + b1_ref[...], 0.0)
    # Stage the intermediate in VMEM scratch (keeps spills predictable and off
    # the vld/vst critical slots for large row tiles); dtype = fc2 MXU operand.
    h_ref[...] = h.astype(h_ref.dtype)
    # fc2: (tb, E) @ (E, P), f32 accumulation; bias in f32.
    y = jnp.dot(h_ref[...], w2_ref[...], preferred_element_type=jnp.float32)
    o_ref[...] = (y + b2_ref[...]).astype(o_ref.dtype)


def query_projection(x, w1, b1, w2, b2, *, block_b=None, param_dtype=None):
    """2-layer MLP y = relu(x @ w1 + b1) @ w2 + b2 (matches PyTorch fc1->ReLU->fc2).

    x:  [B, E]
    w1: [E, E]   stored as [in_features, out_features] (transposed vs PyTorch)
    b1: [E]
    w2: [E, P]   stored as [in_features, out_features]
    b2: [P]
    param_dtype: optional MXU operand dtype for x/w1/w2 (e.g. jnp.bfloat16 on
      v6e/v7x). Accumulation, bias add and ReLU stay in f32.
    """
    B, E = x.shape
    assert w1.shape == (E, E) and b1.shape == (E,)
    P = w2.shape[1]
    assert w2.shape == (E, P) and b2.shape == (P,)

    out_dtype = x.dtype
    if param_dtype is not None:
        x = x.astype(param_dtype)
        w1 = w1.astype(param_dtype)
        w2 = w2.astype(param_dtype)

    itemsize = jnp.dtype(x.dtype).itemsize
    gran = 8 if itemsize >= 4 else 16  # sublane granularity (f32: 8, bf16: 16)

    # Lane-pad feature axes to multiples of 128: full-width MXU contraction /
    # output dims and lane-dense (unmasked) output stores.
    E_pad = _round_up(E, 128)
    P_pad = _round_up(P, 128)

    # Pick a real row tile: big enough to amortize per-step overhead (~0.35us),
    # small enough to leave >=4 pipelined grid steps when B permits.
    if block_b is None:
        block_b = min(512, _round_up(B, gran))
    block_b = _round_up(block_b, gran)
    while block_b > gran and _round_up(B, block_b) // block_b < 4:
        block_b = max(gran, _round_up(block_b // 2, gran))
    B_pad = _round_up(B, block_b)
    grid = (B_pad // block_b,)

    # Zero padding keeps semantics exact: padded input features multiply zero
    # weights, padded fc1 outputs get zero bias -> relu(0)=0 -> contribute 0.
    x_p = jnp.zeros((B_pad, E_pad), x.dtype).at[:B, :E].set(x)
    w1_p = jnp.zeros((E_pad, E_pad), w1.dtype).at[:E, :E].set(w1)
    w2_p = jnp.zeros((E_pad, P_pad), w2.dtype).at[:E, :P].set(w2)
    b1_p = jnp.zeros((1, E_pad), jnp.float32).at[0, :E].set(b1.astype(jnp.float32))
    b2_p = jnp.zeros((1, P_pad), jnp.float32).at[0, :P].set(b2.astype(jnp.float32))

    h_dtype = w2.dtype  # fc2 MXU operand dtype

    # VMEM budget: single-buffered weights/biases + double-buffered x/out tiles
    # + h scratch, with headroom. Explicit so the kernel stays portable to
    # v7x's 64 MiB VMEM without relying on default scoped limits.
    # TODO(synk): add a K-tiled path (grid axis over E_pad marked "arbitrary"
    # with an f32 accumulator scratch) once E_pad*E_pad*itemsize approaches the
    # per-generation VMEM budget; weights here are fully resident.
    vmem_bytes = (
        E_pad * E_pad * jnp.dtype(w1.dtype).itemsize        # w1 (1 buffer)
        + E_pad * P_pad * jnp.dtype(w2.dtype).itemsize      # w2 (1 buffer)
        + (E_pad + P_pad) * 4                               # biases
        + 2 * block_b * E_pad * itemsize                    # x tile (2 buffers)
        + 2 * block_b * P_pad * jnp.dtype(out_dtype).itemsize  # out tile (2 buffers)
        + block_b * E_pad * jnp.dtype(h_dtype).itemsize     # h scratch
    )
    vmem_limit = int(min(max(2 * vmem_bytes, 32 << 20), 100 << 20))

    resident = pl.Buffered(1)  # grid-invariant operands: no double-buffering

    out_padded = pl.pallas_call(
        _query_projection_kernel,
        out_shape=jax.ShapeDtypeStruct((B_pad, P_pad), out_dtype),
        grid_spec=pltpu.PrefetchScalarGridSpec(
            num_scalar_prefetch=0,
            grid=grid,
            in_specs=[
                pl.BlockSpec((block_b, E_pad), lambda i: (i, 0)),             # x tile
                pl.BlockSpec((E_pad, E_pad), lambda i: (0, 0),
                             pipeline_mode=resident),                         # w1
                pl.BlockSpec((1, E_pad), lambda i: (0, 0),
                             pipeline_mode=resident),                         # b1
                pl.BlockSpec((E_pad, P_pad), lambda i: (0, 0),
                             pipeline_mode=resident),                         # w2
                pl.BlockSpec((1, P_pad), lambda i: (0, 0),
                             pipeline_mode=resident),                         # b2
            ],
            out_specs=pl.BlockSpec((block_b, P_pad), lambda i: (i, 0)),
            scratch_shapes=[pltpu.VMEM((block_b, E_pad), h_dtype)],
        ),
        compiler_params=pltpu.CompilerParams(
            dimension_semantics=("parallel",),
            vmem_limit_bytes=vmem_limit,
        ),
    )(x_p, w1_p, b1_p, w2_p, b2_p)

    # Slice the lane/row padding back off.
    return out_padded[:B, :P]


def reference(x, w1, b1, w2, b2):
    h = jnp.maximum(x @ w1 + b1, 0.0)
    return h @ w2 + b2


if __name__ == "__main__":
    key = jax.random.PRNGKey(0)
    k_x, k_w1, k_b1, k_w2, k_b2 = jax.random.split(key, 5)

    batch = 8
    encoding_dim = 32
    projection_dim = 16

    x = jax.random.normal(k_x, (batch, encoding_dim), dtype=jnp.float32)

    # Deterministic parameter init (shapes match nn.Linear(E,E) and nn.Linear(E,P)).
    # Stored as [in_features, out_features] (i.e. already transposed vs PyTorch's [out, in]).
    bound1 = 1.0 / jnp.sqrt(encoding_dim)
    w1 = jax.random.uniform(k_w1, (encoding_dim, encoding_dim),
                            minval=-bound1, maxval=bound1, dtype=jnp.float32)
    b1 = jax.random.uniform(k_b1, (encoding_dim,),
                            minval=-bound1, maxval=bound1, dtype=jnp.float32)
    w2 = jax.random.uniform(k_w2, (encoding_dim, projection_dim),
                            minval=-bound1, maxval=bound1, dtype=jnp.float32)
    b2 = jax.random.uniform(k_b2, (projection_dim,),
                            minval=-bound1, maxval=bound1, dtype=jnp.float32)

    # NOTE: at these tiny shapes (8x32->16) the op is pure launch overhead and
    # should really be fused into the surrounding kernel; this standalone call
    # exists for correctness + to exercise the production-shape tiling path.
    out = query_projection(x, w1, b1, w2, b2)
    out = jax.block_until_ready(out)

    ref = reference(x, w1, b1, w2, b2)
    assert out.shape == (batch, projection_dim), out.shape
    assert jnp.allclose(out, ref, atol=1e-5, rtol=1e-5), "mismatch vs reference"

    print("KERNEL_OK")
</pallas_src>

<mosaic_0001>
module attributes {stable_mosaic.version = 11 : i64} {
  func.func @_query_projection_kernel(%arg0: i32, %arg1: memref<8x128xf32, #tpu.memory_space<vmem>>, %arg2: memref<128x128xf32, #tpu.memory_space<vmem>>, %arg3: memref<1x128xf32, #tpu.memory_space<vmem>>, %arg4: memref<128x128xf32, #tpu.memory_space<vmem>>, %arg5: memref<1x128xf32, #tpu.memory_space<vmem>>, %arg6: memref<8x128xf32, #tpu.memory_space<vmem>>, %arg7: memref<8x128xf32, #tpu.memory_space<vmem>>) attributes {dimension_semantics = [#tpu.dimension_semantics<parallel>], iteration_bounds = array<i64: 1>, scalar_prefetch = 0 : i64, scratch_operands = 1 : i64, tpu.core_type = #tpu.core_type<tc>, window_params = [{transform_indices = @transform_0, window_bounds = array<i64: 8, 128>}, {pipeline_mode = #tpu.pipeline_mode<synchronous>, transform_indices = @transform_1, window_bounds = array<i64: 128, 128>}, {pipeline_mode = #tpu.pipeline_mode<synchronous>, transform_indices = @transform_2, window_bounds = array<i64: 1, 128>}, {pipeline_mode = #tpu.pipeline_mode<synchronous>, transform_indices = @transform_3, window_bounds = array<i64: 128, 128>}, {pipeline_mode = #tpu.pipeline_mode<synchronous>, transform_indices = @transform_4, window_bounds = array<i64: 1, 128>}, {transform_indices = @transform_5, window_bounds = array<i64: 8, 128>}]} {
    %c0 = arith.constant 0 : index
    %c0_0 = arith.constant 0 : index
    %0 = vector.load %arg1[%c0, %c0_0] : memref<8x128xf32, #tpu.memory_space<vmem>>, vector<8x128xf32>
    %c0_1 = arith.constant 0 : index
    %c0_2 = arith.constant 0 : index
    %1 = vector.load %arg2[%c0_1, %c0_2] : memref<128x128xf32, #tpu.memory_space<vmem>>, vector<128x128xf32>
    %cst = arith.constant dense<0.000000e+00> : vector<8x128xf32>
    %2 = tpu.matmul %0, %1, %cst {dimension_numbers = #tpu.dot_dimension_numbers<[1], [0], [0], [1], [0, 0, 1, 1], [], []>} : vector<8x128xf32>, vector<128x128xf32>, vector<8x128xf32> -> vector<8x128xf32>
    %c0_3 = arith.constant 0 : index
    %c0_4 = arith.constant 0 : index
    %3 = vector.load %arg3[%c0_3, %c0_4] : memref<1x128xf32, #tpu.memory_space<vmem>>, vector<1x128xf32>
    %4 = vector.broadcast %3 : vector<1x128xf32> to vector<8x128xf32>
    %5 = arith.addf %2, %4 : vector<8x128xf32>
    %cst_5 = arith.constant 0.000000e+00 : f32
    %6 = vector.broadcast %cst_5 : f32 to vector<8x128xf32>
    %7 = arith.maximumf %5, %6 : vector<8x128xf32>
    %c0_6 = arith.constant 0 : index
    %c0_7 = arith.constant 0 : index
    %8 = vector.load %arg7[%c0_6, %c0_7] : memref<8x128xf32, #tpu.memory_space<vmem>>, vector<8x128xf32>
    tpu.vector_store %arg7[%c0_6, %c0_7], %7 {strides = array<i32>} : memref<8x128xf32, #tpu.memory_space<vmem>>, vector<8x128xf32>,
    %c0_8 = arith.constant 0 : index
    %c0_9 = arith.constant 0 : index
    %9 = vector.load %arg7[%c0_8, %c0_9] : memref<8x128xf32, #tpu.memory_space<vmem>>, vector<8x128xf32>
    %c0_10 = arith.constant 0 : index
    %c0_11 = arith.constant 0 : index
    %10 = vector.load %arg4[%c0_10, %c0_11] : memref<128x128xf32, #tpu.memory_space<vmem>>, vector<128x128xf32>
    %cst_12 = arith.constant dense<0.000000e+00> : vector<8x128xf32>
    %11 = tpu.matmul %9, %10, %cst_12 {dimension_numbers = #tpu.dot_dimension_numbers<[1], [0], [0], [1], [0, 0, 1, 1], [], []>} : vector<8x128xf32>, vector<128x128xf32>, vector<8x128xf32> -> vector<8x128xf32>
    %c0_13 = arith.constant 0 : index
    %c0_14 = arith.constant 0 : index
    %12 = vector.load %arg5[%c0_13, %c0_14] : memref<1x128xf32, #tpu.memory_space<vmem>>, vector<1x128xf32>
    %13 = vector.broadcast %12 : vector<1x128xf32> to vector<8x128xf32>
    %14 = arith.addf %11, %13 : vector<8x128xf32>
    %c0_15 = arith.constant 0 : index
    %c0_16 = arith.constant 0 : index
    %15 = vector.load %arg6[%c0_15, %c0_16] : memref<8x128xf32, #tpu.memory_space<vmem>>, vector<8x128xf32>
    tpu.vector_store %arg6[%c0_15, %c0_16], %14 {strides = array<i32>} : memref<8x128xf32, #tpu.memory_space<vmem>>, vector<8x128xf32>,
    return
  }
  func.func @transform_0(%arg0: i32) -> (i32, i32) {
    %c0_i32 = arith.constant 0 : i32
    %c0_i32_0 = arith.constant 0 : i32
    return %arg0, %c0_i32 : i32, i32
  }
  func.func @transform_1(%arg0: i32) -> (i32, i32) {
    %c0_i32 = arith.constant 0 : i32
    %c0_i32_0 = arith.constant 0 : i32
    %c0_i32_1 = arith.constant 0 : i32
    return %c0_i32, %c0_i32_0 : i32, i32
  }
  func.func @transform_2(%arg0: i32) -> (i32, i32) {
    %c0_i32 = arith.constant 0 : i32
    %c0_i32_0 = arith.constant 0 : i32
    %c0_i32_1 = arith.constant 0 : i32
    return %c0_i32, %c0_i32_0 : i32, i32
  }
  func.func @transform_3(%arg0: i32) -> (i32, i32) {
    %c0_i32 = arith.constant 0 : i32
    %c0_i32_0 = arith.constant 0 : i32
    %c0_i32_1 = arith.constant 0 : i32
    return %c0_i32, %c0_i32_0 : i32, i32
  }
  func.func @transform_4(%arg0: i32) -> (i32, i32) {
    %c0_i32 = arith.constant 0 : i32
    %c0_i32_0 = arith.constant 0 : i32
    %c0_i32_1 = arith.constant 0 : i32
    return %c0_i32, %c0_i32_0 : i32, i32
  }
  func.func @transform_5(%arg0: i32) -> (i32, i32) {
    %c0_i32 = arith.constant 0 : i32
    %c0_i32_0 = arith.constant 0 : i32
    return %arg0, %c0_i32 : i32, i32
  }
}

</mosaic_0001>

<llo_original>
// kernel: tpu_custom_call.1
$region0: #{tpu_custom_call.1}
  #allocation0 [shape = 'u32[]', space=smem, size = 0x4, offset = 0x4, fixed_abs, tag = 'smem constant byte address 0x4 - core index']
  #allocation1 [shape = 'u32[144,128]{1,0:T(1,128)}', space=vmem, size = 0x12000, scoped, tag = 'internal scratch']
  #allocation2 [shape = 'f32[8,128]{1,0:T(8,128)}', space=vmem, size = 0x1000, scoped, tag = 'scratch operand']
  %s0 = inlined_call_operand.hbm [shape: f32[8,128], index: 0, kind: input, shape index: {}]
  %s1 = inlined_call_operand.hbm [shape: f32[128,128], index: 1, kind: input, shape index: {}]
  %s2 = inlined_call_operand.vmem [shape: f32[1,128], index: 2, kind: input, shape index: {}]
  %s3 = inlined_call_operand.hbm [shape: f32[128,128], index: 3, kind: input, shape index: {}]
  %s4 = inlined_call_operand.vmem [shape: f32[1,128], index: 4, kind: input, shape index: {}]
  %s5 = inlined_call_operand.hbm [shape: f32[8,128], index: 5, kind: output, shape index: {}]
  %s6 = sld [smem:[#allocation0]]
  $region42: #{tpu_custom_call.1} parent=0
    _
  %s8 = ssub.s32 1, %s6
  %s9 = scalar_select 0, %s8, %s6
  $region1: #{tpu_custom_call.1} parent=0
    #allocation3 [shape = 'u8[4096]{0}', space=vmem, size = 0x1000, scoped, tag = 'input window, operand 0, single buffered']
    #allocation4 [shape = 's32[1]{0}', space=sflag, size = 0x4, scoped, tag = 'scoped memory for tpu_custom_call.1']
    #allocation5 [shape = 's32[1]{0}', space=sflag, size = 0x4, scoped, tag = 'scoped memory for tpu_custom_call.1']
    #allocation6 [shape = 'u8[65536]{0}', space=vmem, size = 0x10000, scoped, tag = 'input window, operand 1, single buffered']
    #allocation7 [shape = 's32[1]{0}', space=sflag, size = 0x4, scoped, tag = 'scoped memory for tpu_custom_call.1']
    #allocation8 [shape = 'u8[65536]{0}', space=vmem, size = 0x10000, scoped, tag = 'input window, operand 3, single buffered']
    #allocation9 [shape = 'u8[4096]{0}', space=vmem, size = 0x1000, scoped, tag = 'output window, operand 0, single buffered']
    %10 = vsyncpa [#allocation4], 0
    %11 = vsyncpa [#allocation7], 0
    %12 = vsyncpa [#allocation5], 0
    // Predicated region
    $region2: #{tpu_custom_call.1} parent=1 // pred_check
      _
    $region3: #{tpu_custom_call.1} parent=1 // pred_check_branch
      %14 = sbr.rel (0) target = $region5
    $region4: #{tpu_custom_call.1} parent=1 // pred_region
      %s16 = ssub.s32 128, 128
      %17 = vsyncadd [#allocation4], %s16
      %s19 = sshll.u32 [#allocation3], 4
      %s20 = int_to_ptr.vmem [resolvable:$true] %s19
      %22 = dma.hbm_to_vmem [thread:$0]  %s0, 128, %s20, [#allocation4]
    $region5: #{tpu_custom_call.1} parent=1 // pred_fallthru
      _
    // Predicated region
    $region6: #{tpu_custom_call.1} parent=1 // pred_check
      _
    $region7: #{tpu_custom_call.1} parent=1 // pred_check_branch
      %24 = sbr.rel (0) target = $region9
    $region8: #{tpu_custom_call.1} parent=1 // pred_region
      %s26 = ssub.s32 2048, 2048
      %27 = vsyncadd [#allocation7], %s26
      %s28 = sshll.u32 [#allocation6], 4
      %s29 = int_to_ptr.vmem [resolvable:$true] %s28
      %34 = dma.hbm_to_vmem [thread:$0]  %s1, 2048, %s29, [#allocation7], 128, 128, 8
    $region9: #{tpu_custom_call.1} parent=1 // pred_fallthru
      _
    // Predicated region
    $region10: #{tpu_custom_call.1} parent=1 // pred_check
      _
    $region11: #{tpu_custom_call.1} parent=1 // pred_check_branch
      %36 = sbr.rel (0) target = $region13
    $region12: #{tpu_custom_call.1} parent=1 // pred_region
      _
    $region13: #{tpu_custom_call.1} parent=1 // pred_fallthru
      _
    // Predicated region
    $region14: #{tpu_custom_call.1} parent=1 // pred_check
      _
    $region15: #{tpu_custom_call.1} parent=1 // pred_check_branch
      %38 = sbr.rel (0) target = $region17
    $region16: #{tpu_custom_call.1} parent=1 // pred_region
      %s40 = ssub.s32 2048, 2048
      %41 = vsyncadd [#allocation7], %s40
      %s42 = sshll.u32 [#allocation8], 4
      %s43 = int_to_ptr.vmem [resolvable:$true] %s42
      %48 = dma.hbm_to_vmem [thread:$0]  %s3, 2048, %s43, [#allocation7], 128, 128, 8
    $region17: #{tpu_custom_call.1} parent=1 // pred_fallthru
      _
    // Predicated region
    $region18: #{tpu_custom_call.1} parent=1 // pred_check
      _
    $region19: #{tpu_custom_call.1} parent=1 // pred_check_branch
      %50 = sbr.rel (0) target = $region21
    $region20: #{tpu_custom_call.1} parent=1 // pred_region
      _
    $region21: #{tpu_custom_call.1} parent=1 // pred_fallthru
      _
    // Predicated region
    $region22: #{tpu_custom_call.1} parent=1 // pred_check
      _
    $region23: #{tpu_custom_call.1} parent=1 // pred_check_branch
      %52 = sbr.rel (0) target = $region25
    $region24: #{tpu_custom_call.1} parent=1 // pred_region
      %53 = dma.done [#allocation4], 128
    $region25: #{tpu_custom_call.1} parent=1 // pred_fallthru
      _
    // Predicated region
    $region26: #{tpu_custom_call.1} parent=1 // pred_check
      _
    $region27: #{tpu_custom_call.1} parent=1 // pred_check_branch
      %55 = sbr.rel (0) target = $region29
    $region28: #{tpu_custom_call.1} parent=1 // pred_region
      %56 = dma.done [#allocation7], 2048
    $region29: #{tpu_custom_call.1} parent=1 // pred_fallthru
      _
    // Predicated region
    $region30: #{tpu_custom_call.1} parent=1 // pred_check
      _
    $region31: #{tpu_custom_call.1} parent=1 // pred_check_branch
      %58 = sbr.rel (0) target = $region33
    $region32: #{tpu_custom_call.1} parent=1 // pred_region
      %59 = dma.done [#allocation7], 2048
    $region33: #{tpu_custom_call.1} parent=1 // pred_fallthru
      _
    %v60 = vld [vmem:[#allocation3] sm:$0xff]
    %v61 = vld [vmem:[#allocation6] sm:$0xff]
    %v62 = vld [vmem:[#allocation6 + $0x8] sm:$0xff]
    %v63 = vld [vmem:[#allocation6 + $0x10] sm:$0xff]
    %v64 = vld [vmem:[#allocation6 + $0x18] sm:$0xff]
    %v65 = vld [vmem:[#allocation6 + $0x20] sm:$0xff]
    %v66 = vld [vmem:[#allocation6 + $0x28] sm:$0xff]
    %v67 = vld [vmem:[#allocation6 + $0x30] sm:$0xff]
    %v68 = vld [vmem:[#allocation6 + $0x38] sm:$0xff]
    %v69 = vld [vmem:[#allocation6 + $0x40] sm:$0xff]
    %v70 = vld [vmem:[#allocation6 + $0x48] sm:$0xff]
    %v71 = vld [vmem:[#allocation6 + $0x50] sm:$0xff]
    %v72 = vld [vmem:[#allocation6 + $0x58] sm:$0xff]
    %v73 = vld [vmem:[#allocation6 + $0x60] sm:$0xff]
    %v74 = vld [vmem:[#allocation6 + $0x68] sm:$0xff]
    %v75 = vld [vmem:[#allocation6 + $0x70] sm:$0xff]
    %v76 = vld [vmem:[#allocation6 + $0x78] sm:$0xff]
    %v77 = vld [vmem:[%s2] sm:$0x1]
    %v79 = vlaneseq
    %v80 = vshrl.u32 %v79, 7
    %v81 = vsub.s32 0, %v80
    %v82 = vrot.slane %v77, %v81
    %84 = vmatprep.subr.mxu0 0.0
    %85 = vmatpush1.msra.mxu0 %v61
    %86 = vmatprep.subr.mxu0 0.0
    %87 = vmatpush1.msra.mxu0 %v62
    %88 = vmatprep.subr.mxu0 0.0
    %89 = vmatpush1.msra.mxu0 %v63
    %90 = vmatprep.subr.mxu0 0.0
    %91 = vmatpush1.msra.mxu0 %v64
    %92 = vmatprep.subr.mxu0 0.0
    %93 = vmatpush1.msra.mxu0 %v65
    %94 = vmatprep.subr.mxu0 0.0
    %95 = vmatpush1.msra.mxu0 %v66
    %96 = vmatprep.subr.mxu0 0.0
    %97 = vmatpush1.msra.mxu0 %v67
    %98 = vmatprep.subr.mxu0 0.0
    %99 = vmatpush1.msra.mxu0 %v68
    %100 = vmatprep.subr.mxu0 0.0
    %101 = vmatpush1.msra.mxu0 %v69
    %102 = vmatprep.subr.mxu0 0.0
    %103 = vmatpush1.msra.mxu0 %v70
    %104 = vmatprep.subr.mxu0 0.0
    %105 = vmatpush1.msra.mxu0 %v71
    %106 = vmatprep.subr.mxu0 0.0
    %107 = vmatpush1.msra.mxu0 %v72
    %108 = vmatprep.subr.mxu0 0.0
    %109 = vmatpush1.msra.mxu0 %v73
    %110 = vmatprep.subr.mxu0 0.0
    %111 = vmatpush1.msra.mxu0 %v74
    %112 = vmatprep.subr.mxu0 0.0
    %113 = vmatpush1.msra.mxu0 %v75
    %114 = vmatprep.subr.mxu0 0.0
    %115 = vmatpush1.msra.mxu0 %v76
    %116 = vmatprep.subr.mxu0 0.0
    %117 = vmatpush1.msra.mxu0 0.0
    %118 = vmatprep.subr.mxu0 0.0
    %119 = vmatpush1.msra.mxu0 0.0
    %120 = vmatprep.subr.mxu0 0.0
    %121 = vmatpush1.msra.mxu0 0.0
    %122 = vmatprep.subr.mxu0 0.0
    %123 = vmatpush1.msra.mxu0 0.0
    %124 = vmatprep.subr.mxu0 0.0
    %125 = vmatpush1.msra.mxu0 0.0
    %126 = vmatprep.subr.mxu0 0.0
    %127 = vmatpush1.msra.mxu0 0.0
    %128 = vmatprep.subr.mxu0 0.0
    %129 = vmatpush1.msra.mxu0 0.0
    %130 = vmatprep.subr.mxu0 0.0
    %131 = vmatpush1.msra.mxu0 0.0
    %132 = vmatprep.subr.mxu0 0.0
    %133 = vmatpush1.msra.mxu0 0.0
    %134 = vmatprep.subr.mxu0 0.0
    %135 = vmatpush1.msra.mxu0 0.0
    %136 = vmatprep.subr.mxu0 0.0
    %137 = vmatpush1.msra.mxu0 0.0
    %138 = vmatprep.subr.mxu0 0.0
    %139 = vmatpush1.msra.mxu0 0.0
    %140 = vmatprep.subr.mxu0 0.0
    %141 = vmatpush1.msra.mxu0 0.0
    %142 = vmatprep.subr.mxu0 0.0
    %143 = vmatpush1.msra.mxu0 0.0
    %144 = vmatprep.subr.mxu0 0.0
    %145 = vmatpush1.msra.mxu0 0.0
    %146 = vmatprep.subr.mxu0 0.0
    %147 = vmatpush1.msra.mxu0 0.0
    %148 = vmatprep.mubr.f32.mxu0 0.0
    %149 = vmatmul.mubr.f32.gmra.mrb[0].mxu0 %v60
    %v150 = vpop.f32.mrb[0].mxu0
    %v151 = vadd.f32 %v82, %v150
    %v152 = vpop.f32.mrb[0].mxu0
    %153 = vdwg.mxu0
    %v154 = vmax.f32 %v151, 0.0
    %155 = vst [vmem:[#allocation2] sm:$0xff] %v154
    %v156 = vld [vmem:[#allocation2] sm:$0xff]
    %v157 = vld [vmem:[#allocation8] sm:$0xff]
    %v158 = vld [vmem:[#allocation8 + $0x8] sm:$0xff]
    %v159 = vld [vmem:[#allocation8 + $0x10] sm:$0xff]
    %v160 = vld [vmem:[#allocation8 + $0x18] sm:$0xff]
    %v161 = vld [vmem:[#allocation8 + $0x20] sm:$0xff]
    %v162 = vld [vmem:[#allocation8 + $0x28] sm:$0xff]
    %v163 = vld [vmem:[#allocation8 + $0x30] sm:$0xff]
    %v164 = vld [vmem:[#allocation8 + $0x38] sm:$0xff]
    %v165 = vld [vmem:[#allocation8 + $0x40] sm:$0xff]
    %v166 = vld [vmem:[#allocation8 + $0x48] sm:$0xff]
    %v167 = vld [vmem:[#allocation8 + $0x50] sm:$0xff]
    %v168 = vld [vmem:[#allocation8 + $0x58] sm:$0xff]
    %v169 = vld [vmem:[#allocation8 + $0x60] sm:$0xff]
    %v170 = vld [vmem:[#allocation8 + $0x68] sm:$0xff]
    %v171 = vld [vmem:[#allocation8 + $0x70] sm:$0xff]
    %v172 = vld [vmem:[#allocation8 + $0x78] sm:$0xff]
    %v173 = vld [vmem:[%s4] sm:$0x1]
    %v175 = vlaneseq
    %v176 = vshrl.u32 %v175, 7
    %v177 = vsub.s32 0, %v176
    %v178 = vrot.slane %v173, %v177
    %180 = vmatprep.subr.mxu0 0.0
    %181 = vmatpush1.msra.mxu0 %v157
    %182 = vmatprep.subr.mxu0 0.0
    %183 = vmatpush1.msra.mxu0 %v158
    %184 = vmatprep.subr.mxu0 0.0
    %185 = vmatpush1.msra.mxu0 %v159
    %186 = vmatprep.subr.mxu0 0.0
    %187 = vmatpush1.msra.mxu0 %v160
    %188 = vmatprep.subr.mxu0 0.0
    %189 = vmatpush1.msra.mxu0 %v161
    %190 = vmatprep.subr.mxu0 0.0
    %191 = vmatpush1.msra.mxu0 %v162
    %192 = vmatprep.subr.mxu0 0.0
    %193 = vmatpush1.msra.mxu0 %v163
    %194 = vmatprep.subr.mxu0 0.0
    %195 = vmatpush1.msra.mxu0 %v164
    %196 = vmatprep.subr.mxu0 0.0
    %197 = vmatpush1.msra.mxu0 %v165
    %198 = vmatprep.subr.mxu0 0.0
    %199 = vmatpush1.msra.mxu0 %v166
    %200 = vmatprep.subr.mxu0 0.0
    %201 = vmatpush1.msra.mxu0 %v167
    %202 = vmatprep.subr.mxu0 0.0
    %203 = vmatpush1.msra.mxu0 %v168
    %204 = vmatprep.subr.mxu0 0.0
    %205 = vmatpush1.msra.mxu0 %v169
    %206 = vmatprep.subr.mxu0 0.0
    %207 = vmatpush1.msra.mxu0 %v170
    %208 = vmatprep.subr.mxu0 0.0
    %209 = vmatpush1.msra.mxu0 %v171
    %210 = vmatprep.subr.mxu0 0.0
    %211 = vmatpush1.msra.mxu0 %v172
    %212 = vmatprep.subr.mxu0 0.0
    %213 = vmatpush1.msra.mxu0 0.0
    %214 = vmatprep.subr.mxu0 0.0
    %215 = vmatpush1.msra.mxu0 0.0
    %216 = vmatprep.subr.mxu0 0.0
    %217 = vmatpush1.msra.mxu0 0.0
    %218 = vmatprep.subr.mxu0 0.0
    %219 = vmatpush1.msra.mxu0 0.0
    %220 = vmatprep.subr.mxu0 0.0
    %221 = vmatpush1.msra.mxu0 0.0
    %222 = vmatprep.subr.mxu0 0.0
    %223 = vmatpush1.msra.mxu0 0.0
    %224 = vmatprep.subr.mxu0 0.0
    %225 = vmatpush1.msra.mxu0 0.0
    %226 = vmatprep.subr.mxu0 0.0
    %227 = vmatpush1.msra.mxu0 0.0
    %228 = vmatprep.subr.mxu0 0.0
    %229 = vmatpush1.msra.mxu0 0.0
    %230 = vmatprep.subr.mxu0 0.0
    %231 = vmatpush1.msra.mxu0 0.0
    %232 = vmatprep.subr.mxu0 0.0
    %233 = vmatpush1.msra.mxu0 0.0
    %234 = vmatprep.subr.mxu0 0.0
    %235 = vmatpush1.msra.mxu0 0.0
    %236 = vmatprep.subr.mxu0 0.0
    %237 = vmatpush1.msra.mxu0 0.0
    %238 = vmatprep.subr.mxu0 0.0
    %239 = vmatpush1.msra.mxu0 0.0
    %240 = vmatprep.subr.mxu0 0.0
    %241 = vmatpush1.msra.mxu0 0.0
    %242 = vmatprep.subr.mxu0 0.0
    %243 = vmatpush1.msra.mxu0 0.0
    %244 = vmatprep.mubr.f32.mxu0 0.0
    %245 = vmatmul.mubr.f32.gmra.mrb[0].mxu0 %v156
    %v246 = vpop.f32.mrb[0].mxu0
    %v247 = vadd.f32 %v178, %v246
    %v248 = vpop.f32.mrb[0].mxu0
    %249 = vdwg.mxu0
    %250 = vst [vmem:[#allocation9] sm:$0xff] %v247
    // Predicated region
    $region34: #{tpu_custom_call.1} parent=1 // pred_check
      _
    $region35: #{tpu_custom_call.1} parent=1 // pred_check_branch
      %252 = sbr.rel (0) target = $region37
    $region36: #{tpu_custom_call.1} parent=1 // pred_region
      %s254 = ssub.s32 128, 128
      %255 = vsyncadd [#allocation5], %s254
      %s257 = sshll.u32 [#allocation9], 4
      %s258 = int_to_ptr.vmem [resolvable:$true] %s257
      %260 = dma.vmem_to_hbm [thread:$0]  %s258, 128, %s5, [#allocation5]
    $region37: #{tpu_custom_call.1} parent=1 // pred_fallthru
      _
    // Predicated region
    $region38: #{tpu_custom_call.1} parent=1 // pred_check
      _
    $region39: #{tpu_custom_call.1} parent=1 // pred_check_branch
      %262 = sbr.rel (0) target = $region41
    $region40: #{tpu_custom_call.1} parent=1 // pred_region
      %263 = dma.done [#allocation5], 128
    $region41: #{tpu_custom_call.1} parent=1 // pred_fallthru
      _
    %264 = vsyncpa [#allocation4], 1
    %265 = vsyncpa [#allocation7], 1
    %266 = vsyncpa [#allocation5], 1

</llo_original>
